<compile_context>
chip_gen: v6e
topology: v6e:2x2x1
jax: 0.10.0
libtpu: 0.0.40
codegen_flags: <defaults>
</compile_context>

<pallas_src>
import math
import functools

import jax
import jax.numpy as jnp
from jax.experimental import pallas as pl
from jax.experimental.pallas import tpu as pltpu


def _round_up(n, m):
    return ((n + m - 1) // m) * m


@functools.lru_cache(maxsize=None)
def _vmem_capacity_bytes():
    try:
        return int(pltpu.get_tpu_info().vmem_capacity_bytes)
    except Exception:
        return 128 * 1024 * 1024


def _vmem_limit(frac):
    cap = _vmem_capacity_bytes()
    return max(32 * 1024 * 1024, min(int(cap * frac), cap - 4 * 1024 * 1024))


# ----------------------------------------------------------------------------
# Generic tiled Pallas matmul + bias + activation kernel (conv frontend,
# per-layer positional projection).  bf16 operands, f32 accumulation.
# ----------------------------------------------------------------------------
def _mm_kernel(act, scale, nk, x_ref, w_ref, b_ref, o_ref, acc_ref):
    @pl.when(pl.program_id(1) == 0)
    def _():
        acc_ref[...] = jnp.zeros_like(acc_ref)

    acc_ref[...] += jnp.dot(x_ref[...], w_ref[...],
                            preferred_element_type=jnp.float32)

    @pl.when(pl.program_id(1) == nk - 1)
    def _():
        y = acc_ref[...] + b_ref[...]
        if act == "relu":
            y = jnp.maximum(y, 0.0)
        o_ref[...] = (y * scale).astype(o_ref.dtype)


def mm(x, w, b, act="none", scale=1.0, out_dtype=jnp.float32):
    x = x.astype(jnp.bfloat16)
    w = w.astype(jnp.bfloat16)
    b = b.astype(jnp.float32)
    N, K = x.shape
    M = w.shape[1]
    tile_n = 256 if N >= 256 else _round_up(N, 8)
    # Only split the contraction when it is large and splits evenly
    # (partial K blocks would accumulate garbage).
    tile_k = 512 if (K >= 1024 and K % 512 == 0) else K
    nk = pl.cdiv(K, tile_k)
    grid = (pl.cdiv(N, tile_n), nk)
    return pl.pallas_call(
        functools.partial(_mm_kernel, act, scale, nk),
        out_shape=jax.ShapeDtypeStruct((N, M), out_dtype),
        grid=grid,
        in_specs=[
            pl.BlockSpec((tile_n, tile_k), lambda i, k: (i, k)),
            pl.BlockSpec((tile_k, M), lambda i, k: (k, 0)),
            pl.BlockSpec((1, M), lambda i, k: (0, 0)),
        ],
        out_specs=pl.BlockSpec((tile_n, M), lambda i, k: (i, 0)),
        scratch_shapes=[pltpu.VMEM((tile_n, M), jnp.float32)],
        compiler_params=pltpu.CompilerParams(
            dimension_semantics=("parallel", "arbitrary"),
            vmem_limit_bytes=_vmem_limit(0.5)),
    )(x, w, b)


# ----------------------------------------------------------------------------
# Per-encoder-layer Pallas kernel (one batch element per grid step, batch
# axis parallel across TensorCores).  Masks built in-kernel from prefetched
# per-batch valid lengths (SMEM).  t_limit is the original (un-padded) T.
# ----------------------------------------------------------------------------
def make_layer_kernel(D, H, U, t_limit, fuse_after_norm):
    dk = D // H
    inv_sqrt_dk = 1.0 / math.sqrt(dk)
    half = U // 2
    bf16 = jnp.bfloat16

    def ln(v, g, b, eps=1e-5):
        mu = jnp.mean(v, axis=-1, keepdims=True)
        var = jnp.mean((v - mu) ** 2, axis=-1, keepdims=True)
        return (v - mu) * jax.lax.rsqrt(var + eps) * g + b

    def dwconv(v, w, b):
        # v: (Tp, C); w: (K, C); b: (1, C).  Depthwise 'same' conv with zero
        # padding at the *original* sequence extent t_limit; rows >= t_limit
        # (sublane padding) are read as zeros.  Taps ride the XLU (roll),
        # edge handling is an iota mask.
        Tp, _ = v.shape
        K = w.shape[0]
        pad = (K - 1) // 2
        row = jax.lax.broadcasted_iota(jnp.int32, (Tp, 1), 0)
        acc = jnp.zeros_like(v)
        for k in range(K):
            off = k - pad
            sh = (-off) % Tp
            tap = v if sh == 0 else pltpu.roll(v, shift=sh, axis=0)
            src = row + off
            ok = (src >= 0) & (src < t_limit)
            acc = acc + jnp.where(ok, tap, 0.0) * w[k:k + 1, :]
        return acc + b

    def kernel(lens_ref, x_ref, *rest):
        o_ref = rest[-1]
        (g_mha, b_mha, wqkv, bqkv, wo, bo,
         p3, pu3, pv3,
         g_mlp, b_mlp, w1, b1, g_cs, b_cs, wcs, bcs, w2, b2,
         wf1, bf1, wf2, bf2, wm1, wm2, bm,
         g_fin, b_fin, *after) = rest[:-1]

        Tp = x_ref.shape[1]
        valid = lens_ref[pl.program_id(0)]
        key_valid = jax.lax.broadcasted_iota(jnp.int32, (1, 1, Tp), 2) < valid
        mt = (jax.lax.broadcasted_iota(jnp.int32, (Tp, 1), 0)
              < valid).astype(jnp.float32)

        x = x_ref[0]                                    # (Tp, D) f32

        # ---------------- attention branch (RelPositionMultiHeadedAttention)
        x1 = ln(x, g_mha[...], b_mha[...])
        # fused QKV projection: one full-width MXU matmul, no head broadcast
        qkv = jnp.dot(x1.astype(bf16), wqkv[...],
                      preferred_element_type=jnp.float32) + bqkv[...]  # (Tp,3D)

        def heads(m):                                   # (Tp, D) -> (H, Tp, dk)
            return jnp.concatenate(
                [m[:, h * dk:(h + 1) * dk].reshape(1, Tp, dk)
                 for h in range(H)], axis=0)

        q3 = heads(qkv[:, :D])                          # f32
        k3 = heads(qkv[:, D:2 * D]).astype(bf16)
        v3 = heads(qkv[:, 2 * D:]).astype(bf16)

        qu = (q3 + pu3[...]).astype(bf16)
        qv = (q3 + pv3[...]).astype(bf16)
        score_dims = (((2,), (2,)), ((0,), (0,)))       # (H,T,dk) x (H,S,dk)
        ac = jax.lax.dot_general(qu, k3, score_dims,
                                 preferred_element_type=jnp.float32)
        bd = jax.lax.dot_general(qv, p3[...], score_dims,
                                 preferred_element_type=jnp.float32)
        s = (ac + bd) * inv_sqrt_dk                     # (H, Tp, Tp) f32
        s = jnp.where(key_valid, s, -1e30)
        e = jnp.exp(s - jnp.max(s, axis=-1, keepdims=True))
        # masked keys already underflow to exactly 0 -> no (H,T,T) mask mul
        att = e * pl.reciprocal(jnp.sum(e, axis=-1, keepdims=True))
        oh = jax.lax.dot_general(att.astype(bf16), v3,
                                 (((2,), (1,)), ((0,), (0,))),
                                 preferred_element_type=jnp.float32)  # (H,Tp,dk)
        # head re-combination: lane concat + one full-K output projection
        o_cat = jnp.concatenate([oh[h] for h in range(H)], axis=-1)   # (Tp, D)
        x1 = jnp.dot(o_cat.astype(bf16), wo[...],
                     preferred_element_type=jnp.float32) + bo[...]

        # ---------------- cgMLP branch (ConvolutionalGatingMLP)
        x2 = ln(x, g_mlp[...], b_mlp[...])
        u = jnp.dot(x2.astype(bf16), w1[...],
                    preferred_element_type=jnp.float32) + b1[...]
        # TODO(synk): torch nn.GELU is the exact erf GELU; tanh approximation
        # used here since erf lowering in Mosaic is not guaranteed.
        u = jax.nn.gelu(u, approximate=True)
        xr = u[:, :half]
        xg = ln(u[:, half:], g_cs[...], b_cs[...]) * mt
        xg = dwconv(xg, wcs[...], bcs[...]) * mt
        gated = xr * xg                                 # gate_activation='identity'
        x2 = jnp.dot(gated.astype(bf16), w2[...],
                     preferred_element_type=jnp.float32) + b2[...]

        # ---------------- merge: per-branch depthwise conv fusion (no concat)
        x1t = x1 + dwconv(x1, wf1[...], bf1[...])
        x2t = x2 + dwconv(x2, wf2[...], bf2[...])
        merged = (jnp.dot(x1t.astype(bf16), wm1[...],
                          preferred_element_type=jnp.float32)
                  + jnp.dot(x2t.astype(bf16), wm2[...],
                            preferred_element_type=jnp.float32)
                  + bm[...])
        y = ln(x + merged, g_fin[...], b_fin[...])
        if fuse_after_norm:
            g_aft, b_aft = after
            y = ln(y, g_aft[...], b_aft[...])
        o_ref[0] = y

    return kernel


def run_layer(x, lens, plist, D, H, U, t_limit, fuse_after_norm):
    B, Tp, _ = x.shape
    in_specs = [pl.BlockSpec((1, Tp, D), lambda b, lr: (b, 0, 0))]
    for p in plist:
        in_specs.append(
            pl.BlockSpec(tuple(p.shape), lambda b, lr, n=p.ndim: (0,) * n))
    grid_spec = pltpu.PrefetchScalarGridSpec(
        num_scalar_prefetch=1,
        grid=(B,),
        in_specs=in_specs,
        out_specs=pl.BlockSpec((1, Tp, D), lambda b, lr: (b, 0, 0)),
    )
    return pl.pallas_call(
        make_layer_kernel(D, H, U, t_limit, fuse_after_norm),
        out_shape=jax.ShapeDtypeStruct((B, Tp, D), jnp.float32),
        grid_spec=grid_spec,
        compiler_params=pltpu.CompilerParams(
            dimension_semantics=("parallel",),
            vmem_limit_bytes=_vmem_limit(0.75)),
    )(lens, x, *plist)


# ----------------------------------------------------------------------------
# Wrapper-side parameter preprocessing (done once per layer, plain-JAX glue):
# fused QKV weight, bf16 casts, merge-weight split, hoisted pos projection.
# ----------------------------------------------------------------------------
def prepare_layer_params(lp, pos_emb, D, H, U):
    dk = D // H
    Tp = pos_emb.shape[0]
    bf16 = jnp.bfloat16

    wqkv = jnp.concatenate([lp["wq"], lp["wk"], lp["wv"]], axis=1).astype(bf16)
    bqkv = jnp.concatenate([lp["bq"], lp["bk"], lp["bv"]], axis=1)

    # positional projection (no bias) hoisted out of the per-batch grid
    p = mm(pos_emb, lp["wp"], jnp.zeros((1, D), jnp.float32))
    p3 = p.reshape(Tp, H, dk).transpose(1, 0, 2).astype(bf16)

    plist = [
        lp["g_mha"], lp["b_mha"],
        wqkv, bqkv,
        lp["wo"].astype(bf16), lp["bo"],
        p3, lp["pu"][:, None, :], lp["pv"][:, None, :],
        lp["g_mlp"], lp["b_mlp"],
        lp["w1"].astype(bf16), lp["b1"],
        lp["g_cs"], lp["b_cs"],
        lp["wcs"], lp["bcs"],
        lp["w2"].astype(bf16), lp["b2"],
        lp["wf"][:, :D], lp["bf"][:, :D],
        lp["wf"][:, D:], lp["bf"][:, D:],
        lp["wm"][:D].astype(bf16), lp["wm"][D:].astype(bf16), lp["bm"],
        lp["g_fin"], lp["b_fin"],
    ]
    return plist


# ----------------------------------------------------------------------------
# Conv2dSubsampling4 frontend: conv1 in plain XLA (K=9 is MXU-pathological),
# conv2 + output linear as Pallas tiled matmuls with bf16 operands.
# ----------------------------------------------------------------------------
def conv2d_subsample4(xs, ep, D):
    B, Tin, F = xs.shape
    T1 = (Tin - 3) // 2 + 1
    F1 = (F - 3) // 2 + 1
    T2 = (T1 - 3) // 2 + 1
    F2 = (F1 - 3) // 2 + 1

    # conv1: Conv2d(1, D, 3, stride=2), input (B, 1, Tin, F) -- plain XLA
    cols = []
    for ki in range(3):
        for kj in range(3):
            cols.append(xs[:, ki:ki + 2 * (T1 - 1) + 1:2,
                            kj:kj + 2 * (F1 - 1) + 1:2])
    p1 = jnp.stack(cols, axis=-1).reshape(B * T1 * F1, 9)
    w1r = ep["conv1_w"].reshape(D, 9).T                      # (9, D)
    h1 = jnp.maximum(jnp.dot(p1, w1r) + ep["conv1_b"][None, :], 0.0)
    h1 = h1.reshape(B, T1, F1, D).astype(jnp.bfloat16)       # NHWC

    # conv2: Conv2d(D, D, 3, stride=2) -- Pallas matmul, bf16 operands
    cols = []
    for ki in range(3):
        for kj in range(3):
            cols.append(h1[:, ki:ki + 2 * (T2 - 1) + 1:2,
                            kj:kj + 2 * (F2 - 1) + 1:2, :])
    p2 = jnp.stack(cols, axis=-1).reshape(B * T2 * F2, D * 9)  # (ci, ki, kj)
    w2r = ep["conv2_w"].reshape(D, D * 9).T                    # (D*9, D)
    h2 = mm(p2, w2r, ep["conv2_b"].reshape(1, D), act="relu",
            out_dtype=jnp.bfloat16)
    h2 = h2.reshape(B, T2, F2, D)

    # torch: (b,c,t,f) -> transpose(1,2) -> (b,t,c*f), then Linear, then xscale
    h2 = jnp.transpose(h2, (0, 1, 3, 2)).reshape(B * T2, D * F2)
    emb = mm(h2, ep["lin_w"], ep["lin_b"].reshape(1, D),
             act="none", scale=math.sqrt(D))
    return emb.reshape(B, T2, D)


def sinusoid_pos(T, D):
    pos = jnp.arange(T, dtype=jnp.float32)[:, None]
    div = jnp.exp(jnp.arange(0, D, 2, dtype=jnp.float32)
                  * (-math.log(10000.0) / D))
    pe = jnp.zeros((T, D), jnp.float32)
    pe = pe.at[:, 0::2].set(jnp.sin(pos * div))
    pe = pe.at[:, 1::2].set(jnp.cos(pos * div))
    return pe


# ----------------------------------------------------------------------------
# Parameter init (deterministic, synthetic)
# ----------------------------------------------------------------------------
def init_layer_params(key, D, H, U, K_cg, K_m):
    dk = D // H
    ks = jax.random.split(key, 16)

    def w(k, shape, s=0.05):
        return jax.random.normal(k, shape, jnp.float32) * s

    p = {
        "g_mha": jnp.ones((1, D)), "b_mha": jnp.zeros((1, D)),
        "wq": w(ks[0], (D, D)), "bq": jnp.zeros((1, D)),
        "wk": w(ks[1], (D, D)), "bk": jnp.zeros((1, D)),
        "wv": w(ks[2], (D, D)), "bv": jnp.zeros((1, D)),
        "wo": w(ks[3], (D, D)), "bo": jnp.zeros((1, D)),
        "wp": w(ks[4], (D, D)),
        "pu": w(ks[5], (H, dk)), "pv": w(ks[6], (H, dk)),
        "g_mlp": jnp.ones((1, D)), "b_mlp": jnp.zeros((1, D)),
        "w1": w(ks[7], (D, U)), "b1": jnp.zeros((1, U)),
        "g_cs": jnp.ones((1, U // 2)), "b_cs": jnp.zeros((1, U // 2)),
        "wcs": w(ks[8], (K_cg, U // 2)), "bcs": jnp.zeros((1, U // 2)),
        "w2": w(ks[9], (U // 2, D)), "b2": jnp.zeros((1, D)),
        "wf": w(ks[10], (K_m, 2 * D)), "bf": jnp.zeros((1, 2 * D)),
        "wm": w(ks[11], (2 * D, D)), "bm": jnp.zeros((1, D)),
        "g_fin": jnp.ones((1, D)), "b_fin": jnp.zeros((1, D)),
    }
    return p


def init_embed_params(key, Fin, D):
    F1 = (Fin - 3) // 2 + 1
    F2 = (F1 - 3) // 2 + 1
    ks = jax.random.split(key, 3)

    def w(k, shape, s=0.05):
        return jax.random.normal(k, shape, jnp.float32) * s

    return {
        "conv1_w": w(ks[0], (D, 1, 3, 3)), "conv1_b": jnp.zeros((D,)),
        "conv2_w": w(ks[1], (D, D, 3, 3)), "conv2_b": jnp.zeros((D,)),
        "lin_w": w(ks[2], (D * F2, D)), "lin_b": jnp.zeros((D,)),
    }


# ----------------------------------------------------------------------------
# Full encoder forward
# ----------------------------------------------------------------------------
def encoder_forward(xs, ilens, embed_p, layer_params, after_g, after_b,
                    D, H, U):
    assert len(layer_params) >= 1
    B, Tin, _ = xs.shape
    # masks = ~make_pad_mask(ilens, T).unsqueeze(1)
    pad = jnp.arange(Tin)[None, :] >= ilens[:, None]
    masks = (~pad)[:, None, :]                              # (B, 1, Tin) bool

    emb = conv2d_subsample4(xs, embed_p, D)                 # (B, T, D)
    masks = masks[:, :, 2::2][:, :, 2::2]                   # (B, 1, T)
    B, T, _ = emb.shape

    # per-batch valid lengths (prefix masks) for in-kernel mask construction
    lens = jnp.sum(masks.astype(jnp.int32), axis=(1, 2)).astype(jnp.int32)

    # pad T to a sublane multiple; padded rows never leak into valid rows
    # (attention keys masked via lens, conv reads masked at t_limit=T) and
    # are sliced off at the end.
    Tp = _round_up(T, 8)
    if Tp != T:
        emb = jnp.pad(emb, ((0, 0), (0, Tp - T), (0, 0)))
    pos_emb = sinusoid_pos(Tp, D)                           # (Tp, D)

    x = emb
    aux_losses = []
    n_layers = len(layer_params)
    for li, lp in enumerate(layer_params):
        plist = prepare_layer_params(lp, pos_emb, D, H, U)
        fuse = (li == n_layers - 1)                         # fuse after_norm
        if fuse:
            plist = plist + [after_g, after_b]
        x = run_layer(x, lens, plist, D, H, U, T, fuse)
        # experts_feed_forward is None (use_ffn=False) -> aux_loss = [0.0]
        aux_losses.append(jnp.array([0.0], jnp.float32))

    return x[:, :T, :], masks, aux_losses


# ----------------------------------------------------------------------------
if __name__ == "__main__":
    key = jax.random.PRNGKey(0)
    B, Tin, Fin = 2, 32, 20       # batch, input frames, input feature dim
    D, H = 32, 4                  # output_size, attention_heads
    U = 64                        # cgmlp_linear_units
    K_cg = 7                      # cgmlp_conv_kernel
    K_m = 7                       # merge_conv_kernel
    num_blocks = 2

    k_x, k_e, *k_layers = jax.random.split(key, 2 + num_blocks)
    xs = jax.random.normal(k_x, (B, Tin, Fin), jnp.float32)
    ilens = jnp.array([32, 28], jnp.int32)

    embed_p = init_embed_params(k_e, Fin, D)
    layer_params = [init_layer_params(k, D, H, U, K_cg, K_m)
                    for k in k_layers]
    after_g = jnp.ones((1, D), jnp.float32)
    after_b = jnp.zeros((1, D), jnp.float32)

    out, masks, aux = encoder_forward(xs, ilens, embed_p, layer_params,
                                      after_g, after_b, D, H, U)
    jax.block_until_ready(out)
    assert out.shape == (B, (((Tin - 3) // 2 + 1) - 3) // 2 + 1, D)
    print("KERNEL_OK")
</pallas_src>

<mosaic_0001>
module attributes {stable_mosaic.version = 11 : i64} {
  func.func @_mm_kernel(%arg0: i32, %arg1: i32, %arg2: memref<56x288xbf16, #tpu.memory_space<vmem>>, %arg3: memref<288x32xbf16, #tpu.memory_space<vmem>>, %arg4: memref<1x32xf32, #tpu.memory_space<vmem>>, %arg5: memref<56x32xbf16, #tpu.memory_space<vmem>>, %arg6: memref<56x32xf32, #tpu.memory_space<vmem>>) attributes {dimension_semantics = [#tpu.dimension_semantics<parallel>, #tpu.dimension_semantics<arbitrary>], iteration_bounds = array<i64: 1, 1>, scalar_prefetch = 0 : i64, scratch_operands = 1 : i64, tpu.core_type = #tpu.core_type<tc>, window_params = [{transform_indices = @transform_0, window_bounds = array<i64: 56, 288>}, {transform_indices = @transform_1, window_bounds = array<i64: 288, 32>}, {pipeline_mode = #tpu.pipeline_mode<synchronous>, transform_indices = @transform_2, window_bounds = array<i64: 1, 32>}, {transform_indices = @transform_3, window_bounds = array<i64: 56, 32>}]} {
    %c0_i32 = arith.constant 0 : i32
    %0 = arith.cmpi eq, %arg1, %c0_i32 : i32
    %1 = arith.extui %0 : i1 to i32
    %c0_i32_0 = arith.constant 0 : i32
    %2 = arith.cmpi ne, %1, %c0_i32_0 : i32
    scf.if %2 {
      %cst_10 = arith.constant 0.000000e+00 : f32
      %12 = vector.broadcast %cst_10 : f32 to vector<56x32xf32>
      %c0_11 = arith.constant 0 : index
      %c0_12 = arith.constant 0 : index
      %13 = vector.load %arg6[%c0_11, %c0_12] : memref<56x32xf32, #tpu.memory_space<vmem>>, vector<56x32xf32>
      tpu.vector_store %arg6[%c0_11, %c0_12], %12 {strides = array<i32>} : memref<56x32xf32, #tpu.memory_space<vmem>>, vector<56x32xf32>,
    } else {
    }
    %c0 = arith.constant 0 : index
    %c0_1 = arith.constant 0 : index
    %3 = vector.load %arg6[%c0, %c0_1] : memref<56x32xf32, #tpu.memory_space<vmem>>, vector<56x32xf32>
    %c0_2 = arith.constant 0 : index
    %c0_3 = arith.constant 0 : index
    %4 = vector.load %arg2[%c0_2, %c0_3] : memref<56x288xbf16, #tpu.memory_space<vmem>>, vector<56x288xbf16>
    %c0_4 = arith.constant 0 : index
    %c0_5 = arith.constant 0 : index
    %5 = vector.load %arg3[%c0_4, %c0_5] : memref<288x32xbf16, #tpu.memory_space<vmem>>, vector<288x32xbf16>
    %cst = arith.constant dense<0.000000e+00> : vector<56x32xf32>
    %6 = tpu.matmul %4, %5, %cst {dimension_numbers = #tpu.dot_dimension_numbers<[1], [0], [0], [1], [0, 0, 1, 1], [], []>} : vector<56x288xbf16>, vector<288x32xbf16>, vector<56x32xf32> -> vector<56x32xf32>
    %7 = arith.addf %3, %6 : vector<56x32xf32>
    %c0_6 = arith.constant 0 : index
    %c0_7 = arith.constant 0 : index
    %8 = vector.load %arg6[%c0_6, %c0_7] : memref<56x32xf32, #tpu.memory_space<vmem>>, vector<56x32xf32>
    tpu.vector_store %arg6[%c0_6, %c0_7], %7 {strides = array<i32>} : memref<56x32xf32, #tpu.memory_space<vmem>>, vector<56x32xf32>,
    %c0_i32_8 = arith.constant 0 : i32
    %9 = arith.cmpi eq, %arg1, %c0_i32_8 : i32
    %10 = arith.extui %9 : i1 to i32
    %c0_i32_9 = arith.constant 0 : i32
    %11 = arith.cmpi ne, %10, %c0_i32_9 : i32
    scf.if %11 {
      %c0_10 = arith.constant 0 : index
      %c0_11 = arith.constant 0 : index
      %12 = vector.load %arg6[%c0_10, %c0_11] : memref<56x32xf32, #tpu.memory_space<vmem>>, vector<56x32xf32>
      %c0_12 = arith.constant 0 : index
      %c0_13 = arith.constant 0 : index
      %13 = vector.load %arg4[%c0_12, %c0_13] : memref<1x32xf32, #tpu.memory_space<vmem>>, vector<1x32xf32>
      %14 = vector.broadcast %13 : vector<1x32xf32> to vector<56x32xf32>
      %15 = arith.addf %12, %14 : vector<56x32xf32>
      %cst_14 = arith.constant 0.000000e+00 : f32
      %16 = vector.broadcast %cst_14 : f32 to vector<56x32xf32>
      %17 = arith.maximumf %15, %16 : vector<56x32xf32>
      %cst_15 = arith.constant 1.000000e+00 : f32
      %18 = vector.broadcast %cst_15 : f32 to vector<56x32xf32>
      %19 = arith.mulf %17, %18 : vector<56x32xf32>
      %20 = arith.truncf %19 : vector<56x32xf32> to vector<56x32xbf16>
      %c0_16 = arith.constant 0 : index
      %c0_17 = arith.constant 0 : index
      %21 = vector.load %arg5[%c0_16, %c0_17] : memref<56x32xbf16, #tpu.memory_space<vmem>>, vector<56x32xbf16>
      tpu.vector_store %arg5[%c0_16, %c0_17], %20 {strides = array<i32>} : memref<56x32xbf16, #tpu.memory_space<vmem>>, vector<56x32xbf16>,
    } else {
    }
    return
  }
  func.func @transform_0(%arg0: i32, %arg1: i32) -> (i32, i32) {
    %c0_i32 = arith.constant 0 : i32
    return %arg0, %arg1 : i32, i32
  }
  func.func @transform_1(%arg0: i32, %arg1: i32) -> (i32, i32) {
    %c0_i32 = arith.constant 0 : i32
    %c0_i32_0 = arith.constant 0 : i32
    return %arg1, %c0_i32 : i32, i32
  }
  func.func @transform_2(%arg0: i32, %arg1: i32) -> (i32, i32) {
    %c0_i32 = arith.constant 0 : i32
    %c0_i32_0 = arith.constant 0 : i32
    %c0_i32_1 = arith.constant 0 : i32
    return %c0_i32, %c0_i32_0 : i32, i32
  }
  func.func @transform_3(%arg0: i32, %arg1: i32) -> (i32, i32) {
    %c0_i32 = arith.constant 0 : i32
    %c0_i32_0 = arith.constant 0 : i32
    return %arg0, %c0_i32 : i32, i32
  }
}

</mosaic_0001>

<llo_original>
// kernel: tpu_custom_call.1
$region0: #{tpu_custom_call.1}
  #allocation0 [shape = 'u32[]', space=smem, size = 0x4, offset = 0x4, fixed_abs, tag = 'smem constant byte address 0x4 - core index']
  #allocation1 [shape = 'u32[144,128]{1,0:T(1,128)}', space=vmem, size = 0x12000, scoped, tag = 'internal scratch']
  #allocation2 [shape = 'f32[56,32]{1,0:T(8,128)}', space=vmem, size = 0x7000, scoped, tag = 'scratch operand']
  %s0 = inlined_call_operand.vmem [shape: bf16[56,288], index: 0, kind: input, shape index: {}]
  %s1 = inlined_call_operand.vmem [shape: bf16[288,32], index: 1, kind: input, shape index: {}]
  %s2 = inlined_call_operand.vmem [shape: f32[1,32], index: 2, kind: input, shape index: {}]
  %s3 = inlined_call_operand.vmem [shape: bf16[56,32], index: 3, kind: output, shape index: {}]
  %s4 = sld [smem:[#allocation0]]
  $region30: #{tpu_custom_call.1} parent=0
    _
  %s6 = ssub.s32 1, %s4
  %s7 = scalar_select 0, %s6, %s4
  // Predicated region
  $region2: #{tpu_custom_call.1} parent=0 // pred_check
    _
  $region3: #{tpu_custom_call.1} parent=0 // pred_check_branch
    %9 = sbr.rel (0) target = $region5
  $region4: #{tpu_custom_call.1} parent=0 // pred_region
    _
  $region5: #{tpu_custom_call.1} parent=0 // pred_fallthru
    _
  // Predicated region
  $region6: #{tpu_custom_call.1} parent=0 // pred_check
    _
  $region7: #{tpu_custom_call.1} parent=0 // pred_check_branch
    %11 = sbr.rel (0) target = $region9
  $region8: #{tpu_custom_call.1} parent=0 // pred_region
    _
  $region9: #{tpu_custom_call.1} parent=0 // pred_fallthru
    _
  // Predicated region
  $region10: #{tpu_custom_call.1} parent=0 // pred_check
    _
  $region11: #{tpu_custom_call.1} parent=0 // pred_check_branch
    %13 = sbr.rel (0) target = $region13
  $region12: #{tpu_custom_call.1} parent=0 // pred_region
    _
  $region13: #{tpu_custom_call.1} parent=0 // pred_fallthru
    _
  %p15 = scmp.eq.s32.totalorder 0, 0
  // Predicated region
  $region14: #{tpu_custom_call.1} parent=0 // pred_check
    %p16 = pneg %p15
  $region15: #{tpu_custom_call.1} parent=0 // pred_check_branch
    %18 = sbr.rel (%p16) target = $region17
  $region16: #{tpu_custom_call.1} parent=0 // pred_region
    %vm19 = vcmask 261120
    %20 = vst.msk [vmem:[#allocation2] sm:$0xff] %vm19, 0.0
    %21 = vst.msk [vmem:[#allocation2 + $0x8] sm:$0xff] %vm19, 0.0
    %22 = vst.msk [vmem:[#allocation2 + $0x10] sm:$0xff] %vm19, 0.0
    %23 = vst.msk [vmem:[#allocation2 + $0x18] sm:$0xff] %vm19, 0.0
    %24 = vst.msk [vmem:[#allocation2 + $0x20] sm:$0xff] %vm19, 0.0
    %25 = vst.msk [vmem:[#allocation2 + $0x28] sm:$0xff] %vm19, 0.0
    %26 = vst.msk [vmem:[#allocation2 + $0x30] sm:$0xff] %vm19, 0.0
  $region17: #{tpu_custom_call.1} parent=0 // pred_fallthru
    _
  %v27 = vld [vmem:[#allocation2] sm:$0xff]
  %v28 = vld [vmem:[#allocation2 + $0x8] sm:$0xff]
  %v29 = vld [vmem:[#allocation2 + $0x10] sm:$0xff]
  %v30 = vld [vmem:[#allocation2 + $0x18] sm:$0xff]
  %v31 = vld [vmem:[#allocation2 + $0x20] sm:$0xff]
  %v32 = vld [vmem:[#allocation2 + $0x28] sm:$0xff]
  %v33 = vld [vmem:[#allocation2 + $0x30] sm:$0xff]
  %v34 = vld [vmem:[%s0] sm:$0xff]
  %v35 = vld [vmem:[%s0 + $0x8] sm:$0xf]
  %v36 = vld [vmem:[%s0 + $0xc] sm:$0xff]
  %v37 = vld [vmem:[%s0 + $0x14] sm:$0xf]
  %v38 = vld [vmem:[%s0 + $0x18] sm:$0xff]
  %v39 = vld [vmem:[%s0 + $0x20] sm:$0xf]
  %v40 = vld [vmem:[%s0 + $0x24] sm:$0xff]
  %v41 = vld [vmem:[%s0 + $0x2c] sm:$0xf]
  %v42 = vld [vmem:[%s0 + $0x30] sm:$0xff]
  %v43 = vld [vmem:[%s0 + $0x38] sm:$0xf]
  %v44 = vld [vmem:[%s0 + $0x3c] sm:$0xff]
  %v45 = vld [vmem:[%s0 + $0x44] sm:$0xf]
  %v46 = vld [vmem:[%s0 + $0x48] sm:$0xff]
  %v47 = vld [vmem:[%s0 + $0x50] sm:$0xf]
  %v48 = vld [vmem:[%s1] sm:$0xf]
  %v49 = vld [vmem:[%s1 + $0x4] sm:$0xf]
  %v50 = vld [vmem:[%s1 + $0x8] sm:$0xf]
  %v51 = vld [vmem:[%s1 + $0xc] sm:$0xf]
  %v52 = vld [vmem:[%s1 + $0x10] sm:$0xf]
  %v53 = vld [vmem:[%s1 + $0x14] sm:$0xf]
  %v54 = vld [vmem:[%s1 + $0x18] sm:$0xf]
  %v55 = vld [vmem:[%s1 + $0x1c] sm:$0xf]
  %v56 = vld [vmem:[%s1 + $0x20] sm:$0xf]
  %v57 = vld [vmem:[%s1 + $0x24] sm:$0xf]
  %v58 = vld [vmem:[%s1 + $0x28] sm:$0xf]
  %v59 = vld [vmem:[%s1 + $0x2c] sm:$0xf]
  %v60 = vld [vmem:[%s1 + $0x30] sm:$0xf]
  %v61 = vld [vmem:[%s1 + $0x34] sm:$0xf]
  %v62 = vld [vmem:[%s1 + $0x38] sm:$0xf]
  %v63 = vld [vmem:[%s1 + $0x3c] sm:$0xf]
  %v64 = vld [vmem:[%s1 + $0x40] sm:$0xf]
  %v65 = vld [vmem:[%s1 + $0x44] sm:$0xf]
  %v66 = vld [vmem:[%s1 + $0x48] sm:$0xf]
  %v67 = vld [vmem:[%s1 + $0x4c] sm:$0xf]
  %v68 = vld [vmem:[%s1 + $0x50] sm:$0xf]
  %v69 = vld [vmem:[%s1 + $0x54] sm:$0xf]
  %v70 = vld [vmem:[%s1 + $0x58] sm:$0xf]
  %v71 = vld [vmem:[%s1 + $0x5c] sm:$0xf]
  %v72 = vld [vmem:[%s1 + $0x60] sm:$0xf]
  %v73 = vld [vmem:[%s1 + $0x64] sm:$0xf]
  %v74 = vld [vmem:[%s1 + $0x68] sm:$0xf]
  %v75 = vld [vmem:[%s1 + $0x6c] sm:$0xf]
  %v76 = vld [vmem:[%s1 + $0x70] sm:$0xf]
  %v77 = vld [vmem:[%s1 + $0x74] sm:$0xf]
  %v78 = vld [vmem:[%s1 + $0x78] sm:$0xf]
  %v79 = vld [vmem:[%s1 + $0x7c] sm:$0xf]
  %v80 = vld [vmem:[%s1 + $0x80] sm:$0xf]
  %v81 = vld [vmem:[%s1 + $0x84] sm:$0xf]
  %v82 = vld [vmem:[%s1 + $0x88] sm:$0xf]
  %v83 = vld [vmem:[%s1 + $0x8c] sm:$0xf]
  %v98 = vunpack.c.l.b16 %v34
  %v99 = vunpack.c.h.b16 %v34
  %v100 = vunpack.c.l.b16 %v35
  %v101 = vunpack.c.l.b16 %v36
  %v102 = vunpack.c.h.b16 %v36
  %v103 = vunpack.c.l.b16 %v37
  %v104 = vunpack.c.l.b16 %v38
  %v105 = vunpack.c.h.b16 %v38
  %v106 = vunpack.c.l.b16 %v39
  %v107 = vunpack.c.l.b16 %v40
  %v108 = vunpack.c.h.b16 %v40
  %v109 = vunpack.c.l.b16 %v41
  %v110 = vunpack.c.l.b16 %v42
  %v111 = vunpack.c.h.b16 %v42
  %v112 = vunpack.c.l.b16 %v43
  %v113 = vunpack.c.l.b16 %v44
  %v114 = vunpack.c.h.b16 %v44
  %v115 = vunpack.c.l.b16 %v45
  %v116 = vunpack.c.l.b16 %v46
  %v117 = vunpack.c.h.b16 %v46
  %v118 = vunpack.c.l.b16 %v47
  %v119 = vpack.c.b16 %v101, %v98
  %v120 = vpack.c.b16 %v102, %v99
  %v121 = vpack.c.b16 %v103, %v100
  %v122 = vpack.c.b16 %v107, %v104
  %v123 = vpack.c.b16 %v108, %v105
  %v124 = vpack.c.b16 %v109, %v106
  %v125 = vpack.c.b16 %v113, %v110
  %v126 = vpack.c.b16 %v114, %v111
  %v127 = vpack.c.b16 %v115, %v112
  %v128 = vpack.c.b16 %v116, %v116
  %v129 = vpack.c.b16 %v117, %v117
  %v130 = vpack.c.b16 %v118, %v118
  %v175 = vunpack.c.l.b16 %v48
  %v176 = vunpack.c.l.b16 %v49
  %v177 = vunpack.c.l.b16 %v50
  %v178 = vunpack.c.l.b16 %v51
  %v179 = vunpack.c.l.b16 %v52
  %v180 = vunpack.c.l.b16 %v53
  %v181 = vunpack.c.l.b16 %v54
  %v182 = vunpack.c.l.b16 %v55
  %v183 = vunpack.c.l.b16 %v56
  %v184 = vunpack.c.l.b16 %v57
  %v185 = vunpack.c.l.b16 %v58
  %v186 = vunpack.c.l.b16 %v59
  %v187 = vunpack.c.l.b16 %v60
  %v188 = vunpack.c.l.b16 %v61
  %v189 = vunpack.c.l.b16 %v62
  %v190 = vunpack.c.l.b16 %v63
  %v191 = vunpack.c.l.b16 %v64
  %v192 = vunpack.c.l.b16 %v65
  %v193 = vunpack.c.l.b16 %v66
  %v194 = vunpack.c.l.b16 %v67
  %v195 = vunpack.c.l.b16 %v68
  %v196 = vunpack.c.l.b16 %v69
  %v197 = vunpack.c.l.b16 %v70
  %v198 = vunpack.c.l.b16 %v71
  %v199 = vunpack.c.l.b16 %v72
  %v200 = vunpack.c.l.b16 %v73
  %v201 = vunpack.c.l.b16 %v74
  %v202 = vunpack.c.l.b16 %v75
  %v203 = vunpack.c.l.b16 %v76
  %v204 = vunpack.c.l.b16 %v77
  %v205 = vunpack.c.l.b16 %v78
  %v206 = vunpack.c.l.b16 %v79
  %v207 = vunpack.c.l.b16 %v80
  %v208 = vunpack.c.l.b16 %v81
  %v209 = vunpack.c.l.b16 %v82
  %v210 = vunpack.c.l.b16 %v83
  %v211 = vpack.c.b16 %v176, %v175
  %v212 = vpack.c.b16 %v178, %v177
  %v213 = vpack.c.b16 %v180, %v179
  %v214 = vpack.c.b16 %v182, %v181
  %v215 = vpack.c.b16 %v184, %v183
  %v216 = vpack.c.b16 %v186, %v185
  %v217 = vpack.c.b16 %v188, %v187
  %v218 = vpack.c.b16 %v190, %v189
  %v219 = vpack.c.b16 %v192, %v191
  %v220 = vpack.c.b16 %v194, %v193
  %v221 = vpack.c.b16 %v196, %v195
  %v222 = vpack.c.b16 %v198, %v197
  %v223 = vpack.c.b16 %v200, %v199
  %v224 = vpack.c.b16 %v202, %v201
  %v225 = vpack.c.b16 %v204, %v203
  %v226 = vpack.c.b16 %v206, %v205
  %v227 = vpack.c.b16 %v208, %v207
  %v228 = vpack.c.b16 %v210, %v209
  %vm247 = vcmask 261120
  %v249 = vsel %vm247, %v121, 0
  %v252 = vsel %vm247, %v124, 0
  %v255 = vsel %vm247, %v127, 0
  %v258 = vsel %vm247, %v130, 0
  %260 = vmatprep.subr.bf16.mxu0 0
  %261 = vmatpush1.bf16.msra.mxu0 %v218
  %262 = vmatprep.subr.bf16.mxu0 0
  %263 = vmatpush1.bf16.msra.mxu0 %v217
  %264 = vmatprep.subr.bf16.mxu0 0
  %265 = vmatpush1.bf16.msra.mxu0 %v216
  %266 = vmatprep.subr.bf16.mxu0 0
  %267 = vmatpush1.bf16.msra.mxu0 %v215
  %268 = vmatprep.subr.bf16.mxu0 0
  %269 = vmatpush1.bf16.msra.mxu0 %v214
  %270 = vmatprep.subr.bf16.mxu0 0
  %271 = vmatpush1.bf16.msra.mxu0 %v213
  %272 = vmatprep.subr.bf16.mxu0 0
  %273 = vmatpush1.bf16.msra.mxu0 %v212
  %274 = vmatprep.subr.bf16.mxu0 0
  %275 = vmatpush1.bf16.msra.mxu0 %v211
  %276 = vmatprep.subr.bf16.mxu0 0
  %277 = vmatpush2.bf16.msra.mxu0 %v226
  %278 = vmatprep.subr.bf16.mxu0 0
  %279 = vmatpush2.bf16.msra.mxu0 %v225
  %280 = vmatprep.subr.bf16.mxu0 0
  %281 = vmatpush2.bf16.msra.mxu0 %v224
  %282 = vmatprep.subr.bf16.mxu0 0
  %283 = vmatpush2.bf16.msra.mxu0 %v223
  %284 = vmatprep.subr.bf16.mxu0 0
  %285 = vmatpush2.bf16.msra.mxu0 %v222
  %286 = vmatprep.subr.bf16.mxu0 0
  %287 = vmatpush2.bf16.msra.mxu0 %v221
  %288 = vmatprep.subr.bf16.mxu0 0
  %289 = vmatpush2.bf16.msra.mxu0 %v220
  %290 = vmatprep.subr.bf16.mxu0 0
  %291 = vmatpush2.bf16.msra.mxu0 %v219
  %292 = vmatprep.mubr.bf16.mxu0 %v120
  %293 = vmatmul.mubr.bf16.gmra.mxu0 %v119
  %v294 = vpop.f32.mrf.mxu0
  %v295 = vadd.f32 0.0, %v294
  %v296 = vpop.f32.mrf.mxu0
  %v297 = vpop.f32.mrf.mxu0
  %v298 = vadd.f32 0.0, %v297
  %v299 = vpop.f32.mrf.mxu0
  %300 = vmatprep.mubr.bf16.mxu0 %v123
  %301 = vmatmul.mubr.bf16.gmra.mxu0 %v122
  %v302 = vpop.f32.mrf.mxu0
  %v303 = vadd.f32 0.0, %v302
  %v304 = vpop.f32.mrf.mxu0
  %v305 = vpop.f32.mrf.mxu0
  %v306 = vadd.f32 0.0, %v305
  %v307 = vpop.f32.mrf.mxu0
  %308 = vmatprep.mubr.bf16.mxu0 %v126
  %309 = vmatmul.mubr.bf16.gmra.mxu0 %v125
  %v310 = vpop.f32.mrf.mxu0
  %v311 = vadd.f32 0.0, %v310
  %v312 = vpop.f32.mrf.mxu0
  %v313 = vpop.f32.mrf.mxu0
  %v314 = vadd.f32 0.0, %v313
  %v315 = vpop.f32.mrf.mxu0
  %316 = vmatprep.mubr.bf16.mxu0 %v129
  %317 = vmatmul.mubr.bf16.gmra.mxu0 %v128
  %v318 = vpop.f32.mrf.mxu0
  %v319 = vadd.f32 0.0, %v318
  %v320 = vpop.f32.mrf.mxu0
  %v321 = vpop.f32.mrf.mxu0
  %v322 = vpop.f32.mrf.mxu0
  %323 = vdwg.mxu0
  %324 = vmatprep.subr.bf16.mxu0 0
  %325 = vmatpush1.bf16.msra.mxu0 0
  %326 = vmatprep.subr.bf16.mxu0 0
  %327 = vmatpush1.bf16.msra.mxu0 0
  %328 = vmatprep.subr.bf16.mxu0 0
  %329 = vmatpush1.bf16.msra.mxu0 0
  %330 = vmatprep.subr.bf16.mxu0 0
  %331 = vmatpush1.bf16.msra.mxu0 0
  %332 = vmatprep.subr.bf16.mxu0 0
  %333 = vmatpush1.bf16.msra.mxu0 0
  %334 = vmatprep.subr.bf16.mxu0 0
  %335 = vmatpush1.bf16.msra.mxu0 0
  %336 = vmatprep.subr.bf16.mxu0 0
  %337 = vmatpush1.bf16.msra.mxu0 %v228
  %338 = vmatprep.subr.bf16.mxu0 0
  %339 = vmatpush1.bf16.msra.mxu0 %v227
  %340 = vmatprep.subr.bf16.mxu0 0
  %341 = vmatpush2.bf16.msra.mxu0 0
  %342 = vmatprep.subr.bf16.mxu0 0
  %343 = vmatpush2.bf16.msra.mxu0 0
  %344 = vmatprep.subr.bf16.mxu0 0
  %345 = vmatpush2.bf16.msra.mxu0 0
  %346 = vmatprep.subr.bf16.mxu0 0
  %347 = vmatpush2.bf16.msra.mxu0 0
  %348 = vmatprep.subr.bf16.mxu0 0
  %349 = vmatpush2.bf16.msra.mxu0 0
  %350 = vmatprep.subr.bf16.mxu0 0
  %351 = vmatpush2.bf16.msra.mxu0 0
  %352 = vmatprep.subr.bf16.mxu0 0
  %353 = vmatpush2.bf16.msra.mxu0 0
  %354 = vmatprep.subr.bf16.mxu0 0
  %355 = vmatpush2.bf16.msra.mxu0 0
  %356 = vmatprep.mubr.bf16.mxu0 0
  %357 = vmatmul.mubr.bf16.gmra.mxu0 %v249
  %v358 = vpop.f32.mrf.mxu0
  %v359 = vadd.f32 %v295, %v358
  %v360 = vpop.f32.mrf.mxu0
  %v361 = vpop.f32.mrf.mxu0
  %v362 = vadd.f32 %v298, %v361
  %v363 = vpop.f32.mrf.mxu0
  %364 = vmatprep.mubr.bf16.mxu0 0
  %365 = vmatmul.mubr.bf16.gmra.mxu0 %v252
  %v366 = vpop.f32.mrf.mxu0
  %v367 = vadd.f32 %v303, %v366
  %v368 = vpop.f32.mrf.mxu0
  %v369 = vpop.f32.mrf.mxu0
  %v370 = vadd.f32 %v306, %v369
  %v371 = vpop.f32.mrf.mxu0
  %372 = vmatprep.mubr.bf16.mxu0 0
  %373 = vmatmul.mubr.bf16.gmra.mxu0 %v255
  %v374 = vpop.f32.mrf.mxu0
  %v375 = vadd.f32 %v311, %v374
  %v376 = vpop.f32.mrf.mxu0
  %v377 = vpop.f32.mrf.mxu0
  %v378 = vadd.f32 %v314, %v377
  %v379 = vpop.f32.mrf.mxu0
  %380 = vmatprep.mubr.bf16.mxu0 0
  %381 = vmatmul.mubr.bf16.gmra.mxu0 %v258
  %v382 = vpop.f32.mrf.mxu0
  %v383 = vadd.f32 %v319, %v382
  %v384 = vpop.f32.mrf.mxu0
  %v385 = vpop.f32.mrf.mxu0
  %v386 = vpop.f32.mrf.mxu0
  %387 = vdwg.mxu0
  %v388 = vadd.f32 %v27, %v359
  %v389 = vadd.f32 %v28, %v362
  %v390 = vadd.f32 %v29, %v367
  %v391 = vadd.f32 %v30, %v370
  %v392 = vadd.f32 %v31, %v375
  %v393 = vadd.f32 %v32, %v378
  %v394 = vadd.f32 %v33, %v383
  %395 = vst.msk [vmem:[#allocation2] sm:$0xff] %vm247, %v388
  %396 = vst.msk [vmem:[#allocation2 + $0x8] sm:$0xff] %vm247, %v389
  %397 = vst.msk [vmem:[#allocation2 + $0x10] sm:$0xff] %vm247, %v390
  %398 = vst.msk [vmem:[#allocation2 + $0x18] sm:$0xff] %vm247, %v391
  %399 = vst.msk [vmem:[#allocation2 + $0x20] sm:$0xff] %vm247, %v392
  %400 = vst.msk [vmem:[#allocation2 + $0x28] sm:$0xff] %vm247, %v393
  %401 = vst.msk [vmem:[#allocation2 + $0x30] sm:$0xff] %vm247, %v394
  // Predicated region
  $region18: #{tpu_custom_call.1} parent=0 // pred_check
    %p402 = pneg %p15
  $region19: #{tpu_custom_call.1} parent=0 // pred_check_branch
    %404 = sbr.rel (%p402) target = $region21
  $region20: #{tpu_custom_call.1} parent=0 // pred_region
    %v405 = vld [vmem:[#allocation2] sm:$0xff]
    %v406 = vld [vmem:[#allocation2 + $0x8] sm:$0xff]
    %v407 = vld [vmem:[#allocation2 + $0x10] sm:$0xff]
    %v408 = vld [vmem:[#allocation2 + $0x18] sm:$0xff]
    %v409 = vld [vmem:[#allocation2 + $0x20] sm:$0xff]
    %v410 = vld [vmem:[#allocation2 + $0x28] sm:$0xff]
    %v411 = vld [vmem:[#allocation2 + $0x30] sm:$0xff]
    %v412 = vld [vmem:[%s2] sm:$0x1]
    %v414 = vlaneseq
    %v415 = vshrl.u32 %v414, 7
    %v416 = vsub.s32 0, %v415
    %v417 = vrot.slane %v412, %v416
    %v419 = vadd.f32 %v405, %v417
    %v420 = vadd.f32 %v406, %v417
    %v421 = vadd.f32 %v407, %v417
    %v422 = vadd.f32 %v408, %v417
    %v423 = vadd.f32 %v409, %v417
    %v424 = vadd.f32 %v410, %v417
    %v425 = vadd.f32 %v411, %v417
    %v426 = vmax.f32 %v419, 0.0
    %v427 = vmax.f32 %v420, 0.0
    %v428 = vmax.f32 %v421, 0.0
    %v429 = vmax.f32 %v422, 0.0
    %v430 = vmax.f32 %v423, 0.0
    %v431 = vmax.f32 %v424, 0.0
    %v432 = vmax.f32 %v425, 0.0
    %v433 = vpack.c.bf16 %v427, %v426
    %v434 = vpack.c.bf16 %v429, %v428
    %v435 = vpack.c.bf16 %v431, %v430
    %v436 = vpack.c.bf16 %v432, %v432
    %v441 = vunpack.c.l.b16 %v433
    %v442 = vunpack.c.h.b16 %v433
    %v443 = vunpack.c.l.b16 %v434
    %v444 = vunpack.c.h.b16 %v434
    %v445 = vunpack.c.l.b16 %v435
    %v446 = vunpack.c.h.b16 %v435
    %v447 = vunpack.c.l.b16 %v436
    %v448 = vpack.c.b16 %v441, %v441
    %v449 = vpack.c.b16 %v442, %v442
    %v450 = vpack.c.b16 %v443, %v443
    %v451 = vpack.c.b16 %v444, %v444
    %v452 = vpack.c.b16 %v445, %v445
    %v453 = vpack.c.b16 %v446, %v446
    %v454 = vpack.c.b16 %v447, %v447
    %vm462 = vcmask 257024
    %463 = vst.msk [vmem:[%s3] sm:$0xf] %vm462, %v448
    %464 = vst.msk [vmem:[%s3 + $0x4] sm:$0xf] %vm462, %v449
    %465 = vst.msk [vmem:[%s3 + $0x8] sm:$0xf] %vm462, %v450
    %466 = vst.msk [vmem:[%s3 + $0xc] sm:$0xf] %vm462, %v451
    %467 = vst.msk [vmem:[%s3 + $0x10] sm:$0xf] %vm462, %v452
    %468 = vst.msk [vmem:[%s3 + $0x14] sm:$0xf] %vm462, %v453
    %469 = vst.msk [vmem:[%s3 + $0x18] sm:$0xf] %vm462, %v454
  $region21: #{tpu_custom_call.1} parent=0 // pred_fallthru
    _
  // Predicated region
  $region22: #{tpu_custom_call.1} parent=0 // pred_check
    _
  $region23: #{tpu_custom_call.1} parent=0 // pred_check_branch
    %471 = sbr.rel (0) target = $region25
  $region24: #{tpu_custom_call.1} parent=0 // pred_region
    _
  $region25: #{tpu_custom_call.1} parent=0 // pred_fallthru
    _
  // Predicated region
  $region26: #{tpu_custom_call.1} parent=0 // pred_check
    _
  $region27: #{tpu_custom_call.1} parent=0 // pred_check_branch
    %473 = sbr.rel (0) target = $region29
  $region28: #{tpu_custom_call.1} parent=0 // pred_region
    _
  $region29: #{tpu_custom_call.1} parent=0 // pred_fallthru
    _

</llo_original>
